<compile_context>
chip_gen: v5e
topology: v5e:2x2
jax: 0.10.0
libtpu: 0.0.40
codegen_flags: <defaults>
</compile_context>

<pallas_src>
import functools

import jax
import jax.numpy as jnp
from jax import lax
from jax.experimental import pallas as pl
from jax.experimental.pallas import tpu as pltpu


def _pick_channel_tile(C):
    """Largest convenient sublane-friendly channel tile that divides C."""
    for cand in (64, 32, 16, 8):
        if C % cand == 0:
            return cand
    return C


def eca_sa_kernel(x_ref, w_eca_ref, w_sa_ref, b_sa_ref, out_ref,
                  ch_pad_ref, scale_ref,
                  *, C, H, W, CT, k_size, kernel_size):
    pad_c = (k_size - 1) // 2
    pad_s = (kernel_size - 1) // 2
    HW = H * W
    num_ct = C // CT
    inv_hw = 1.0 / HW
    inv_c = 1.0 / C

    # ---------------- eca_layer ----------------
    # Zero only the pad rows of the channel-conv scratch; the data rows are
    # always fully overwritten below.
    if pad_c > 0:
        ch_pad_ref[0:pad_c, :] = jnp.zeros((pad_c, 1), jnp.float32)
        ch_pad_ref[pad_c + C:2 * pad_c + C, :] = jnp.zeros((pad_c, 1), jnp.float32)

    # Global average pool per channel, one channel tile at a time (no full
    # (C, HW) f32 temporary even for bf16 inputs).
    def avg_body(ct, carry):
        c0 = ct * CT
        xt = x_ref[0, pl.ds(c0, CT), :].astype(jnp.float32)
        ch_pad_ref[pl.ds(pad_c + c0, CT), :] = (
            jnp.sum(xt, axis=1, keepdims=True) * inv_hw)
        return carry

    lax.fori_loop(0, num_ct, avg_body, 0)

    # Conv1d(1, 1, k_size, zero pad, no bias) over channels -> sigmoid -> scale.
    y = jnp.zeros((C, 1), jnp.float32)
    for j in range(k_size):                         # static unroll (k_size = 3)
        y = y + w_eca_ref[j] * ch_pad_ref[j:j + C, :]
    scale_ref[...] = jax.nn.sigmoid(y)              # (C, 1)

    # ---------------- SpatialAttention pooling ----------------
    # Channel max / mean of (scale * x) WITHOUT materializing chan_att: the
    # per-channel scale is applied on the fly per channel tile.
    def red_body(ct, carry):
        mp, ap = carry
        c0 = ct * CT
        xt = x_ref[0, pl.ds(c0, CT), :].astype(jnp.float32)
        st = scale_ref[pl.ds(c0, CT), :]
        xs = xt * st
        mp = jnp.maximum(mp, jnp.max(xs, axis=0, keepdims=True))
        ap = ap + jnp.sum(xs, axis=0, keepdims=True)
        return mp, ap

    mp, ap = lax.fori_loop(
        0, num_ct, red_body,
        (jnp.full((1, HW), -jnp.inf, dtype=jnp.float32),
         jnp.zeros((1, HW), dtype=jnp.float32)))
    ap = ap * inv_c                                  # channel mean

    # -------- KxK spatial conv (2-in / 1-out, zero pad, bias) + sigmoid --------
    # Lane-dense formulation on the flattened (1, HW) pooled maps:
    #   * roll is linear, so each (di, dj) tap rolls the pre-combined map
    #     w_max*mp + w_avg*ap once (8 lane rolls total for a 3x3 kernel),
    #   * zero padding at the image border is enforced with in-kernel iota
    #     masks (no HBM mask input, no padded scratch, no unaligned slices).
    lane = lax.broadcasted_iota(jnp.int32, (1, HW), 1)
    if (W & (W - 1)) == 0:
        col = jnp.bitwise_and(lane, W - 1)           # lane % W (power-of-two W)
    else:
        col = lane % W

    kk = kernel_size * kernel_size
    acc = jnp.zeros((1, HW), jnp.float32)
    for di in range(kernel_size):                    # static unroll (3x3)
        dr = di - pad_s
        lo = max(0, -dr) * W
        hi = min(H, H - dr) * W
        row_ok = jnp.logical_and(lane >= lo, lane < hi)
        for dj in range(kernel_size):
            dc = dj - pad_s
            col_ok = jnp.logical_and(col + dc >= 0, col + dc <= W - 1)
            mask = jnp.logical_and(row_ok, col_ok).astype(jnp.float32)
            w_max = w_sa_ref[0 * kk + di * kernel_size + dj]
            w_avg = w_sa_ref[1 * kk + di * kernel_size + dj]
            combo = w_max * mp + w_avg * ap
            off = dr * W + dc                        # flattened tap offset
            if off != 0:
                combo = pltpu.roll(combo, shift=(-off) % HW, axis=1)
            acc = acc + combo * mask
    att = jax.nn.sigmoid(acc + b_sa_ref[0])          # (1, HW)

    # ---------------- fpp = att * scale * x ----------------
    # Written per channel tile (chan_att is never stored); output stays
    # lane-dense so stores are unmasked vst's when HW % 128 == 0.
    def out_body(ct, carry):
        c0 = ct * CT
        xt = x_ref[0, pl.ds(c0, CT), :].astype(jnp.float32)
        st = scale_ref[pl.ds(c0, CT), :]
        out_ref[0, pl.ds(c0, CT), :] = (xt * (att * st)).astype(out_ref.dtype)
        return carry

    lax.fori_loop(0, num_ct, out_body, 0)


def eca_sa(x, w_eca, w_sa_flat, b_sa, *, k_size=3, kernel_size=3):
    assert k_size % 2 == 1, "Odd eca kernel size required"
    assert kernel_size % 2 == 1, "Odd spatial kernel size required"
    B, C, H, W = x.shape
    HW = H * W
    pad_c = (k_size - 1) // 2
    CT = _pick_channel_tile(C)

    # Lane-dense view of the feature map (free reshape: contiguous NCHW).
    xr = x.reshape(B, C, HW)

    kern = functools.partial(eca_sa_kernel, C=C, H=H, W=W, CT=CT,
                             k_size=k_size, kernel_size=kernel_size)

    # VMEM budget: double-buffered in + out blocks, tiny scratch, and headroom
    # for in-kernel temporaries (pooled maps / masks / per-tile f32 casts).
    # Cap below physical VMEM to leave compiler headroom (esp. v7x's 64 MiB).
    elem = jnp.dtype(x.dtype).itemsize
    block_bytes = C * HW * elem
    temps_bytes = (3 * CT * HW + 16 * HW) * 4 + (1 << 20)
    need = 4 * block_bytes + temps_bytes
    try:
        phys = pltpu.get_tpu_info().vmem_capacity_bytes
    except Exception:
        phys = 64 * 1024 * 1024
    cap = int(phys * 0.8)
    vmem_limit = max(16 * 1024 * 1024, min(need, cap))

    out_flat = pl.pallas_call(
        kern,
        out_shape=jax.ShapeDtypeStruct((B, C, HW), x.dtype),
        grid_spec=pltpu.PrefetchScalarGridSpec(
            num_scalar_prefetch=0,
            grid=(B,),
            in_specs=[
                pl.BlockSpec((1, C, HW), lambda b: (b, 0, 0)),        # x
                pl.BlockSpec(memory_space=pltpu.MemorySpace.SMEM),    # w_eca (k,)
                pl.BlockSpec(memory_space=pltpu.MemorySpace.SMEM),    # w_sa (2*ks*ks,)
                pl.BlockSpec(memory_space=pltpu.MemorySpace.SMEM),    # b_sa (1,)
            ],
            out_specs=pl.BlockSpec((1, C, HW), lambda b: (b, 0, 0)),
            scratch_shapes=[
                pltpu.VMEM((C + 2 * pad_c, 1), jnp.float32),  # padded channel avg
                pltpu.VMEM((C, 1), jnp.float32),              # per-channel eca scale
            ],
        ),
        compiler_params=pltpu.CompilerParams(
            dimension_semantics=("parallel",),
            vmem_limit_bytes=vmem_limit),
    )(xr, w_eca, w_sa_flat, b_sa)

    return out_flat.reshape(B, C, H, W)


def ref_eca_sa(x, w_eca, w_sa_flat, b_sa, *, k_size=3, kernel_size=3):
    """Pure-JAX reference mirroring the PyTorch forward."""
    B, C, H, W = x.shape
    pad_c = (k_size - 1) // 2
    pad_s = (kernel_size - 1) // 2

    y = jnp.mean(x, axis=(2, 3))                                   # (B, C)
    yp = jnp.pad(y, ((0, 0), (pad_c, pad_c)))
    conv1 = sum(w_eca[j] * yp[:, j:j + C] for j in range(k_size))  # (B, C)
    chan = x * jax.nn.sigmoid(conv1)[:, :, None, None]

    mp = jnp.max(chan, axis=1)
    ap = jnp.mean(chan, axis=1)
    pool = jnp.stack([mp, ap], axis=1)                             # (B, 2, H, W)
    pp = jnp.pad(pool, ((0, 0), (0, 0), (pad_s, pad_s), (pad_s, pad_s)))
    w2 = w_sa_flat.reshape(2, kernel_size, kernel_size)
    acc = jnp.zeros((B, H, W), jnp.float32)
    for ic in range(2):
        for di in range(kernel_size):
            for dj in range(kernel_size):
                acc = acc + w2[ic, di, dj] * pp[:, ic, di:di + H, dj:dj + W]
    att = jax.nn.sigmoid(acc + b_sa[0])[:, None, :, :]
    return att * chan


if __name__ == "__main__":
    B, C, H, W = 2, 4, 16, 16
    k_size, kernel_size = 3, 3

    key = jax.random.PRNGKey(0)
    kx, k1, k2, k3 = jax.random.split(key, 4)

    x = jax.random.normal(kx, (B, C, H, W), dtype=jnp.float32)
    # Parameter shapes match the PyTorch module:
    #   eca conv1d weight   : (1, 1, k_size)   -> stored flat (k_size,)
    #   spatial conv2d w    : (1, 2, ks, ks)   -> stored flat (2*ks*ks,)
    #   spatial conv2d bias : (1,)
    w_eca = 0.3 * jax.random.normal(k1, (k_size,), dtype=jnp.float32)
    w_sa = 0.3 * jax.random.normal(k2, (2 * kernel_size * kernel_size,),
                                   dtype=jnp.float32)
    b_sa = 0.1 * jax.random.normal(k3, (1,), dtype=jnp.float32)

    expected = ref_eca_sa(x, w_eca, w_sa, b_sa,
                          k_size=k_size, kernel_size=kernel_size)

    # float32 path
    out = eca_sa(x, w_eca, w_sa, b_sa, k_size=k_size, kernel_size=kernel_size)
    out = jax.block_until_ready(out)
    assert out.shape == (B, C, H, W)
    assert jnp.allclose(out, expected, atol=2e-5, rtol=2e-5), \
        "f32 mismatch vs reference"

    # bf16 I/O path (kernel is HBM-bound; math stays f32 inside the kernel).
    out_bf16 = eca_sa(x.astype(jnp.bfloat16), w_eca, w_sa, b_sa,
                      k_size=k_size, kernel_size=kernel_size)
    out_bf16 = jax.block_until_ready(out_bf16)
    assert out_bf16.dtype == jnp.bfloat16
    assert jnp.allclose(out_bf16.astype(jnp.float32), expected,
                        atol=1e-1, rtol=5e-2), "bf16 mismatch vs reference"

    print("KERNEL_OK")
</pallas_src>

<mosaic_0001>
module attributes {stable_mosaic.version = 11 : i64} {
  func.func @eca_sa_kernel(%arg0: i32, %arg1: memref<1x4x256xf32, #tpu.memory_space<vmem>>, %arg2: memref<3xf32, #tpu.memory_space<smem>>, %arg3: memref<18xf32, #tpu.memory_space<smem>>, %arg4: memref<1xf32, #tpu.memory_space<smem>>, %arg5: memref<1x4x256xf32, #tpu.memory_space<vmem>>, %arg6: memref<6x1xf32, #tpu.memory_space<vmem>>, %arg7: memref<4x1xf32, #tpu.memory_space<vmem>>) attributes {dimension_semantics = [#tpu.dimension_semantics<parallel>], iteration_bounds = array<i64: 2>, scalar_prefetch = 0 : i64, scratch_operands = 2 : i64, tpu.core_type = #tpu.core_type<tc>, window_params = [{transform_indices = @transform_0, window_bounds = array<i64: 1, 4, 256>}, {transform_indices = @transform_1, window_bounds = array<i64: 3>}, {transform_indices = @transform_2, window_bounds = array<i64: 18>}, {transform_indices = @transform_3, window_bounds = array<i64: 1>}, {transform_indices = @transform_4, window_bounds = array<i64: 1, 4, 256>}]} {
    %cst = arith.constant 0.000000e+00 : f32
    %0 = vector.broadcast %cst : f32 to vector<1x1xf32>
    %c0 = arith.constant 0 : index
    %c0_0 = arith.constant 0 : index
    %1 = vector.load %arg6[%c0, %c0_0] : memref<6x1xf32, #tpu.memory_space<vmem>>, vector<1x1xf32>
    tpu.vector_store %arg6[%c0, %c0_0], %0 {strides = array<i32>} : memref<6x1xf32, #tpu.memory_space<vmem>>, vector<1x1xf32>,
    %cst_1 = arith.constant 0.000000e+00 : f32
    %2 = vector.broadcast %cst_1 : f32 to vector<1x1xf32>
    %c5 = arith.constant 5 : index
    %c0_2 = arith.constant 0 : index
    %3 = vector.load %arg6[%c5, %c0_2] : memref<6x1xf32, #tpu.memory_space<vmem>>, vector<1x1xf32>
    tpu.vector_store %arg6[%c5, %c0_2], %2 {strides = array<i32>} : memref<6x1xf32, #tpu.memory_space<vmem>>, vector<1x1xf32>,
    %c0_i32 = arith.constant 0 : i32
    %c4_i32 = arith.constant 4 : i32
    %4 = arith.muli %c0_i32, %c4_i32 : i32
    %c0_3 = arith.constant 0 : index
    %5 = arith.index_cast %4 : i32 to index
    %c0_4 = arith.constant 0 : index
    %6 = vector.load %arg1[%c0_3, %5, %c0_4] : memref<1x4x256xf32, #tpu.memory_space<vmem>>, vector<1x4x256xf32>
    %7 = vector.shape_cast %6 : vector<1x4x256xf32> to vector<4x256xf32>
    %cst_5 = arith.constant dense<0.000000e+00> : vector<4xf32>
    %8 = vector.multi_reduction <add>, %7, %cst_5 [1] : vector<4x256xf32> to vector<4xf32>
    %9 = vector.shape_cast %8 : vector<4xf32> to vector<4x1xf32>
    %cst_6 = arith.constant 3.906250e-03 : f32
    %10 = vector.broadcast %cst_6 : f32 to vector<4x1xf32>
    %11 = arith.mulf %9, %10 : vector<4x1xf32>
    %c1_i32 = arith.constant 1 : i32
    %12 = arith.addi %c1_i32, %4 : i32
    %13 = arith.index_cast %12 : i32 to index
    %c0_7 = arith.constant 0 : index
    %14 = vector.load %arg6[%13, %c0_7] : memref<6x1xf32, #tpu.memory_space<vmem>>, vector<4x1xf32>
    tpu.vector_store %arg6[%13, %c0_7], %11 {strides = array<i32>} : memref<6x1xf32, #tpu.memory_space<vmem>>, vector<4x1xf32>,
    %c1_i32_8 = arith.constant 1 : i32
    %cst_9 = arith.constant 0.000000e+00 : f32
    %15 = vector.broadcast %cst_9 : f32 to vector<4x1xf32>
    %c0_10 = arith.constant 0 : index
    %16 = memref.load %arg2[%c0_10] : memref<3xf32, #tpu.memory_space<smem>>
    %c0_11 = arith.constant 0 : index
    %c0_12 = arith.constant 0 : index
    %17 = vector.load %arg6[%c0_11, %c0_12] : memref<6x1xf32, #tpu.memory_space<vmem>>, vector<4x1xf32>
    %18 = vector.broadcast %16 : f32 to vector<4x1xf32>
    %19 = arith.mulf %18, %17 : vector<4x1xf32>
    %20 = arith.addf %15, %19 : vector<4x1xf32>
    %c1 = arith.constant 1 : index
    %21 = memref.load %arg2[%c1] : memref<3xf32, #tpu.memory_space<smem>>
    %c1_13 = arith.constant 1 : index
    %c0_14 = arith.constant 0 : index
    %22 = vector.load %arg6[%c1_13, %c0_14] : memref<6x1xf32, #tpu.memory_space<vmem>>, vector<4x1xf32>
    %23 = vector.broadcast %21 : f32 to vector<4x1xf32>
    %24 = arith.mulf %23, %22 : vector<4x1xf32>
    %25 = arith.addf %20, %24 : vector<4x1xf32>
    %c2 = arith.constant 2 : index
    %26 = memref.load %arg2[%c2] : memref<3xf32, #tpu.memory_space<smem>>
    %c2_15 = arith.constant 2 : index
    %c0_16 = arith.constant 0 : index
    %27 = vector.load %arg6[%c2_15, %c0_16] : memref<6x1xf32, #tpu.memory_space<vmem>>, vector<4x1xf32>
    %28 = vector.broadcast %26 : f32 to vector<4x1xf32>
    %29 = arith.mulf %28, %27 : vector<4x1xf32>
    %30 = arith.addf %25, %29 : vector<4x1xf32>
    %31 = arith.negf %30 : vector<4x1xf32>
    %32 = math.exp %31 : vector<4x1xf32>
    %cst_17 = arith.constant 1.000000e+00 : f32
    %33 = vector.broadcast %cst_17 : f32 to vector<4x1xf32>
    %34 = arith.addf %33, %32 : vector<4x1xf32>
    %35 = arith.divf %33, %34 : vector<4x1xf32>
    %c0_18 = arith.constant 0 : index
    %c0_19 = arith.constant 0 : index
    %36 = vector.load %arg7[%c0_18, %c0_19] : memref<4x1xf32, #tpu.memory_space<vmem>>, vector<4x1xf32>
    tpu.vector_store %arg7[%c0_18, %c0_19], %35 {strides = array<i32>} : memref<4x1xf32, #tpu.memory_space<vmem>>, vector<4x1xf32>,
    %cst_20 = arith.constant 0xFF800000 : f32
    %37 = vector.broadcast %cst_20 : f32 to vector<1x256xf32>
    %cst_21 = arith.constant 0.000000e+00 : f32
    %38 = vector.broadcast %cst_21 : f32 to vector<1x256xf32>
    %c0_i32_22 = arith.constant 0 : i32
    %c4_i32_23 = arith.constant 4 : i32
    %39 = arith.muli %c0_i32_22, %c4_i32_23 : i32
    %c0_24 = arith.constant 0 : index
    %40 = arith.index_cast %39 : i32 to index
    %c0_25 = arith.constant 0 : index
    %41 = vector.load %arg1[%c0_24, %40, %c0_25] : memref<1x4x256xf32, #tpu.memory_space<vmem>>, vector<1x4x256xf32>
    %42 = vector.shape_cast %41 : vector<1x4x256xf32> to vector<4x256xf32>
    %43 = arith.index_cast %39 : i32 to index
    %c0_26 = arith.constant 0 : index
    %44 = vector.load %arg7[%43, %c0_26] : memref<4x1xf32, #tpu.memory_space<vmem>>, vector<4x1xf32>
    %45 = vector.broadcast %44 : vector<4x1xf32> to vector<4x256xf32>
    %46 = arith.mulf %42, %45 : vector<4x256xf32>
    %cst_27 = arith.constant dense<0xFF800000> : vector<256xf32>
    %47 = vector.multi_reduction <maximumf>, %46, %cst_27 [0] : vector<4x256xf32> to vector<256xf32>
    %48 = vector.shape_cast %47 : vector<256xf32> to vector<1x256xf32>
    %49 = arith.maximumf %37, %48 : vector<1x256xf32>
    %cst_28 = arith.constant dense<0.000000e+00> : vector<256xf32>
    %50 = vector.multi_reduction <add>, %46, %cst_28 [0] : vector<4x256xf32> to vector<256xf32>
    %51 = vector.shape_cast %50 : vector<256xf32> to vector<1x256xf32>
    %52 = arith.addf %38, %51 : vector<1x256xf32>
    %c1_i32_29 = arith.constant 1 : i32
    %cst_30 = arith.constant 2.500000e-01 : f32
    %53 = vector.broadcast %cst_30 : f32 to vector<1x256xf32>
    %54 = arith.mulf %52, %53 : vector<1x256xf32>
    %55 = tpu.iota {dimensions = array<i32: 1>} : vector<1x256xi32>
    %c15_i32 = arith.constant 15 : i32
    %56 = vector.broadcast %c15_i32 : i32 to vector<1x256xi32>
    %57 = arith.andi %55, %56 : vector<1x256xi32>
    %cst_31 = arith.constant 0.000000e+00 : f32
    %58 = vector.broadcast %cst_31 : f32 to vector<1x256xf32>
    %c16_i32 = arith.constant 16 : i32
    %59 = vector.broadcast %c16_i32 : i32 to vector<1x256xi32>
    %60 = arith.cmpi sge, %55, %59 : vector<1x256xi32>
    %c256_i32 = arith.constant 256 : i32
    %61 = vector.broadcast %c256_i32 : i32 to vector<1x256xi32>
    %62 = arith.cmpi slt, %55, %61 : vector<1x256xi32>
    %63 = arith.andi %60, %62 : vector<1x256xi1>
    %c-1_i32 = arith.constant -1 : i32
    %64 = vector.broadcast %c-1_i32 : i32 to vector<1x256xi32>
    %65 = arith.addi %57, %64 : vector<1x256xi32>
    %c0_i32_32 = arith.constant 0 : i32
    %66 = vector.broadcast %c0_i32_32 : i32 to vector<1x256xi32>
    %67 = arith.cmpi sge, %65, %66 : vector<1x256xi32>
    %c-1_i32_33 = arith.constant -1 : i32
    %68 = vector.broadcast %c-1_i32_33 : i32 to vector<1x256xi32>
    %69 = arith.addi %57, %68 : vector<1x256xi32>
    %c15_i32_34 = arith.constant 15 : i32
    %70 = vector.broadcast %c15_i32_34 : i32 to vector<1x256xi32>
    %71 = arith.cmpi sle, %69, %70 : vector<1x256xi32>
    %72 = arith.andi %67, %71 : vector<1x256xi1>
    %73 = arith.andi %63, %72 : vector<1x256xi1>
    %74 = arith.extui %73 : vector<1x256xi1> to vector<1x256xi32>
    %75 = arith.sitofp %74 : vector<1x256xi32> to vector<1x256xf32>
    %c0_35 = arith.constant 0 : index
    %76 = memref.load %arg3[%c0_35] : memref<18xf32, #tpu.memory_space<smem>>
    %c9 = arith.constant 9 : index
    %77 = memref.load %arg3[%c9] : memref<18xf32, #tpu.memory_space<smem>>
    %78 = vector.broadcast %76 : f32 to vector<1x256xf32>
    %79 = arith.mulf %78, %49 : vector<1x256xf32>
    %80 = vector.broadcast %77 : f32 to vector<1x256xf32>
    %81 = arith.mulf %80, %54 : vector<1x256xf32>
    %82 = arith.addf %79, %81 : vector<1x256xf32>
    %c17_i32 = arith.constant 17 : i32
    %83 = tpu.dynamic_rotate %82 by %c17_i32 dim 1 : vector<1x256xf32>, i32 -> vector<1x256xf32>
    %84 = arith.mulf %83, %75 : vector<1x256xf32>
    %85 = arith.addf %58, %84 : vector<1x256xf32>
    %c0_i32_36 = arith.constant 0 : i32
    %86 = vector.broadcast %c0_i32_36 : i32 to vector<1x256xi32>
    %87 = arith.addi %57, %86 : vector<1x256xi32>
    %c0_i32_37 = arith.constant 0 : i32
    %88 = vector.broadcast %c0_i32_37 : i32 to vector<1x256xi32>
    %89 = arith.cmpi sge, %87, %88 : vector<1x256xi32>
    %c0_i32_38 = arith.constant 0 : i32
    %90 = vector.broadcast %c0_i32_38 : i32 to vector<1x256xi32>
    %91 = arith.addi %57, %90 : vector<1x256xi32>
    %c15_i32_39 = arith.constant 15 : i32
    %92 = vector.broadcast %c15_i32_39 : i32 to vector<1x256xi32>
    %93 = arith.cmpi sle, %91, %92 : vector<1x256xi32>
    %94 = arith.andi %89, %93 : vector<1x256xi1>
    %95 = arith.andi %63, %94 : vector<1x256xi1>
    %96 = arith.extui %95 : vector<1x256xi1> to vector<1x256xi32>
    %97 = arith.sitofp %96 : vector<1x256xi32> to vector<1x256xf32>
    %c1_40 = arith.constant 1 : index
    %98 = memref.load %arg3[%c1_40] : memref<18xf32, #tpu.memory_space<smem>>
    %c10 = arith.constant 10 : index
    %99 = memref.load %arg3[%c10] : memref<18xf32, #tpu.memory_space<smem>>
    %100 = vector.broadcast %98 : f32 to vector<1x256xf32>
    %101 = arith.mulf %100, %49 : vector<1x256xf32>
    %102 = vector.broadcast %99 : f32 to vector<1x256xf32>
    %103 = arith.mulf %102, %54 : vector<1x256xf32>
    %104 = arith.addf %101, %103 : vector<1x256xf32>
    %c16_i32_41 = arith.constant 16 : i32
    %105 = tpu.dynamic_rotate %104 by %c16_i32_41 dim 1 : vector<1x256xf32>, i32 -> vector<1x256xf32>
    %106 = arith.mulf %105, %97 : vector<1x256xf32>
    %107 = arith.addf %85, %106 : vector<1x256xf32>
    %c1_i32_42 = arith.constant 1 : i32
    %108 = vector.broadcast %c1_i32_42 : i32 to vector<1x256xi32>
    %109 = arith.addi %57, %108 : vector<1x256xi32>
    %c0_i32_43 = arith.constant 0 : i32
    %110 = vector.broadcast %c0_i32_43 : i32 to vector<1x256xi32>
    %111 = arith.cmpi sge, %109, %110 : vector<1x256xi32>
    %c1_i32_44 = arith.constant 1 : i32
    %112 = vector.broadcast %c1_i32_44 : i32 to vector<1x256xi32>
    %113 = arith.addi %57, %112 : vector<1x256xi32>
    %c15_i32_45 = arith.constant 15 : i32
    %114 = vector.broadcast %c15_i32_45 : i32 to vector<1x256xi32>
    %115 = arith.cmpi sle, %113, %114 : vector<1x256xi32>
    %116 = arith.andi %111, %115 : vector<1x256xi1>
    %117 = arith.andi %63, %116 : vector<1x256xi1>
    %118 = arith.extui %117 : vector<1x256xi1> to vector<1x256xi32>
    %119 = arith.sitofp %118 : vector<1x256xi32> to vector<1x256xf32>
    %c2_46 = arith.constant 2 : index
    %120 = memref.load %arg3[%c2_46] : memref<18xf32, #tpu.memory_space<smem>>
    %c11 = arith.constant 11 : index
    %121 = memref.load %arg3[%c11] : memref<18xf32, #tpu.memory_space<smem>>
    %122 = vector.broadcast %120 : f32 to vector<1x256xf32>
    %123 = arith.mulf %122, %49 : vector<1x256xf32>
    %124 = vector.broadcast %121 : f32 to vector<1x256xf32>
    %125 = arith.mulf %124, %54 : vector<1x256xf32>
    %126 = arith.addf %123, %125 : vector<1x256xf32>
    %c15_i32_47 = arith.constant 15 : i32
    %127 = tpu.dynamic_rotate %126 by %c15_i32_47 dim 1 : vector<1x256xf32>, i32 -> vector<1x256xf32>
    %128 = arith.mulf %127, %119 : vector<1x256xf32>
    %129 = arith.addf %107, %128 : vector<1x256xf32>
    %c0_i32_48 = arith.constant 0 : i32
    %130 = vector.broadcast %c0_i32_48 : i32 to vector<1x256xi32>
    %131 = arith.cmpi sge, %55, %130 : vector<1x256xi32>
    %c256_i32_49 = arith.constant 256 : i32
    %132 = vector.broadcast %c256_i32_49 : i32 to vector<1x256xi32>
    %133 = arith.cmpi slt, %55, %132 : vector<1x256xi32>
    %134 = arith.andi %131, %133 : vector<1x256xi1>
    %c-1_i32_50 = arith.constant -1 : i32
    %135 = vector.broadcast %c-1_i32_50 : i32 to vector<1x256xi32>
    %136 = arith.addi %57, %135 : vector<1x256xi32>
    %c0_i32_51 = arith.constant 0 : i32
    %137 = vector.broadcast %c0_i32_51 : i32 to vector<1x256xi32>
    %138 = arith.cmpi sge, %136, %137 : vector<1x256xi32>
    %c-1_i32_52 = arith.constant -1 : i32
    %139 = vector.broadcast %c-1_i32_52 : i32 to vector<1x256xi32>
    %140 = arith.addi %57, %139 : vector<1x256xi32>
    %c15_i32_53 = arith.constant 15 : i32
    %141 = vector.broadcast %c15_i32_53 : i32 to vector<1x256xi32>
    %142 = arith.cmpi sle, %140, %141 : vector<1x256xi32>
    %143 = arith.andi %138, %142 : vector<1x256xi1>
    %144 = arith.andi %134, %143 : vector<1x256xi1>
    %145 = arith.extui %144 : vector<1x256xi1> to vector<1x256xi32>
    %146 = arith.sitofp %145 : vector<1x256xi32> to vector<1x256xf32>
    %c3 = arith.constant 3 : index
    %147 = memref.load %arg3[%c3] : memref<18xf32, #tpu.memory_space<smem>>
    %c12 = arith.constant 12 : index
    %148 = memref.load %arg3[%c12] : memref<18xf32, #tpu.memory_space<smem>>
    %149 = vector.broadcast %147 : f32 to vector<1x256xf32>
    %150 = arith.mulf %149, %49 : vector<1x256xf32>
    %151 = vector.broadcast %148 : f32 to vector<1x256xf32>
    %152 = arith.mulf %151, %54 : vector<1x256xf32>
    %153 = arith.addf %150, %152 : vector<1x256xf32>
    %c1_i32_54 = arith.constant 1 : i32
    %154 = tpu.dynamic_rotate %153 by %c1_i32_54 dim 1 : vector<1x256xf32>, i32 -> vector<1x256xf32>
    %155 = arith.mulf %154, %146 : vector<1x256xf32>
    %156 = arith.addf %129, %155 : vector<1x256xf32>
    %c0_i32_55 = arith.constant 0 : i32
    %157 = vector.broadcast %c0_i32_55 : i32 to vector<1x256xi32>
    %158 = arith.addi %57, %157 : vector<1x256xi32>
    %c0_i32_56 = arith.constant 0 : i32
    %159 = vector.broadcast %c0_i32_56 : i32 to vector<1x256xi32>
    %160 = arith.cmpi sge, %158, %159 : vector<1x256xi32>
    %c0_i32_57 = arith.constant 0 : i32
    %161 = vector.broadcast %c0_i32_57 : i32 to vector<1x256xi32>
    %162 = arith.addi %57, %161 : vector<1x256xi32>
    %c15_i32_58 = arith.constant 15 : i32
    %163 = vector.broadcast %c15_i32_58 : i32 to vector<1x256xi32>
    %164 = arith.cmpi sle, %162, %163 : vector<1x256xi32>
    %165 = arith.andi %160, %164 : vector<1x256xi1>
    %166 = arith.andi %134, %165 : vector<1x256xi1>
    %167 = arith.extui %166 : vector<1x256xi1> to vector<1x256xi32>
    %168 = arith.sitofp %167 : vector<1x256xi32> to vector<1x256xf32>
    %c4 = arith.constant 4 : index
    %169 = memref.load %arg3[%c4] : memref<18xf32, #tpu.memory_space<smem>>
    %c13 = arith.constant 13 : index
    %170 = memref.load %arg3[%c13] : memref<18xf32, #tpu.memory_space<smem>>
    %171 = vector.broadcast %169 : f32 to vector<1x256xf32>
    %172 = arith.mulf %171, %49 : vector<1x256xf32>
    %173 = vector.broadcast %170 : f32 to vector<1x256xf32>
    %174 = arith.mulf %173, %54 : vector<1x256xf32>
    %175 = arith.addf %172, %174 : vector<1x256xf32>
    %176 = arith.mulf %175, %168 : vector<1x256xf32>
    %177 = arith.addf %156, %176 : vector<1x256xf32>
    %c1_i32_59 = arith.constant 1 : i32
    %178 = vector.broadcast %c1_i32_59 : i32 to vector<1x256xi32>
    %179 = arith.addi %57, %178 : vector<1x256xi32>
    %c0_i32_60 = arith.constant 0 : i32
    %180 = vector.broadcast %c0_i32_60 : i32 to vector<1x256xi32>
    %181 = arith.cmpi sge, %179, %180 : vector<1x256xi32>
    %c1_i32_61 = arith.constant 1 : i32
    %182 = vector.broadcast %c1_i32_61 : i32 to vector<1x256xi32>
    %183 = arith.addi %57, %182 : vector<1x256xi32>
    %c15_i32_62 = arith.constant 15 : i32
    %184 = vector.broadcast %c15_i32_62 : i32 to vector<1x256xi32>
    %185 = arith.cmpi sle, %183, %184 : vector<1x256xi32>
    %186 = arith.andi %181, %185 : vector<1x256xi1>
    %187 = arith.andi %134, %186 : vector<1x256xi1>
    %188 = arith.extui %187 : vector<1x256xi1> to vector<1x256xi32>
    %189 = arith.sitofp %188 : vector<1x256xi32> to vector<1x256xf32>
    %c5_63 = arith.constant 5 : index
    %190 = memref.load %arg3[%c5_63] : memref<18xf32, #tpu.memory_space<smem>>
    %c14 = arith.constant 14 : index
    %191 = memref.load %arg3[%c14] : memref<18xf32, #tpu.memory_space<smem>>
    %192 = vector.broadcast %190 : f32 to vector<1x256xf32>
    %193 = arith.mulf %192, %49 : vector<1x256xf32>
    %194 = vector.broadcast %191 : f32 to vector<1x256xf32>
    %195 = arith.mulf %194, %54 : vector<1x256xf32>
    %196 = arith.addf %193, %195 : vector<1x256xf32>
    %c255_i32 = arith.constant 255 : i32
    %197 = tpu.dynamic_rotate %196 by %c255_i32 dim 1 : vector<1x256xf32>, i32 -> vector<1x256xf32>
    %198 = arith.mulf %197, %189 : vector<1x256xf32>
    %199 = arith.addf %177, %198 : vector<1x256xf32>
    %c0_i32_64 = arith.constant 0 : i32
    %200 = vector.broadcast %c0_i32_64 : i32 to vector<1x256xi32>
    %201 = arith.cmpi sge, %55, %200 : vector<1x256xi32>
    %c240_i32 = arith.constant 240 : i32
    %202 = vector.broadcast %c240_i32 : i32 to vector<1x256xi32>
    %203 = arith.cmpi slt, %55, %202 : vector<1x256xi32>
    %204 = arith.andi %201, %203 : vector<1x256xi1>
    %c-1_i32_65 = arith.constant -1 : i32
    %205 = vector.broadcast %c-1_i32_65 : i32 to vector<1x256xi32>
    %206 = arith.addi %57, %205 : vector<1x256xi32>
    %c0_i32_66 = arith.constant 0 : i32
    %207 = vector.broadcast %c0_i32_66 : i32 to vector<1x256xi32>
    %208 = arith.cmpi sge, %206, %207 : vector<1x256xi32>
    %c-1_i32_67 = arith.constant -1 : i32
    %209 = vector.broadcast %c-1_i32_67 : i32 to vector<1x256xi32>
    %210 = arith.addi %57, %209 : vector<1x256xi32>
    %c15_i32_68 = arith.constant 15 : i32
    %211 = vector.broadcast %c15_i32_68 : i32 to vector<1x256xi32>
    %212 = arith.cmpi sle, %210, %211 : vector<1x256xi32>
    %213 = arith.andi %208, %212 : vector<1x256xi1>
    %214 = arith.andi %204, %213 : vector<1x256xi1>
    %215 = arith.extui %214 : vector<1x256xi1> to vector<1x256xi32>
    %216 = arith.sitofp %215 : vector<1x256xi32> to vector<1x256xf32>
    %c6 = arith.constant 6 : index
    %217 = memref.load %arg3[%c6] : memref<18xf32, #tpu.memory_space<smem>>
    %c15 = arith.constant 15 : index
    %218 = memref.load %arg3[%c15] : memref<18xf32, #tpu.memory_space<smem>>
    %219 = vector.broadcast %217 : f32 to vector<1x256xf32>
    %220 = arith.mulf %219, %49 : vector<1x256xf32>
    %221 = vector.broadcast %218 : f32 to vector<1x256xf32>
    %222 = arith.mulf %221, %54 : vector<1x256xf32>
    %223 = arith.addf %220, %222 : vector<1x256xf32>
    %c241_i32 = arith.constant 241 : i32
    %224 = tpu.dynamic_rotate %223 by %c241_i32 dim 1 : vector<1x256xf32>, i32 -> vector<1x256xf32>
    %225 = arith.mulf %224, %216 : vector<1x256xf32>
    %226 = arith.addf %199, %225 : vector<1x256xf32>
    %c0_i32_69 = arith.constant 0 : i32
    %227 = vector.broadcast %c0_i32_69 : i32 to vector<1x256xi32>
    %228 = arith.addi %57, %227 : vector<1x256xi32>
    %c0_i32_70 = arith.constant 0 : i32
    %229 = vector.broadcast %c0_i32_70 : i32 to vector<1x256xi32>
    %230 = arith.cmpi sge, %228, %229 : vector<1x256xi32>
    %c0_i32_71 = arith.constant 0 : i32
    %231 = vector.broadcast %c0_i32_71 : i32 to vector<1x256xi32>
    %232 = arith.addi %57, %231 : vector<1x256xi32>
    %c15_i32_72 = arith.constant 15 : i32
    %233 = vector.broadcast %c15_i32_72 : i32 to vector<1x256xi32>
    %234 = arith.cmpi sle, %232, %233 : vector<1x256xi32>
    %235 = arith.andi %230, %234 : vector<1x256xi1>
    %236 = arith.andi %204, %235 : vector<1x256xi1>
    %237 = arith.extui %236 : vector<1x256xi1> to vector<1x256xi32>
    %238 = arith.sitofp %237 : vector<1x256xi32> to vector<1x256xf32>
    %c7 = arith.constant 7 : index
    %239 = memref.load %arg3[%c7] : memref<18xf32, #tpu.memory_space<smem>>
    %c16 = arith.constant 16 : index
    %240 = memref.load %arg3[%c16] : memref<18xf32, #tpu.memory_space<smem>>
    %241 = vector.broadcast %239 : f32 to vector<1x256xf32>
    %242 = arith.mulf %241, %49 : vector<1x256xf32>
    %243 = vector.broadcast %240 : f32 to vector<1x256xf32>
    %244 = arith.mulf %243, %54 : vector<1x256xf32>
    %245 = arith.addf %242, %244 : vector<1x256xf32>
    %c240_i32_73 = arith.constant 240 : i32
    %246 = tpu.dynamic_rotate %245 by %c240_i32_73 dim 1 : vector<1x256xf32>, i32 -> vector<1x256xf32>
    %247 = arith.mulf %246, %238 : vector<1x256xf32>
    %248 = arith.addf %226, %247 : vector<1x256xf32>
    %c1_i32_74 = arith.constant 1 : i32
    %249 = vector.broadcast %c1_i32_74 : i32 to vector<1x256xi32>
    %250 = arith.addi %57, %249 : vector<1x256xi32>
    %c0_i32_75 = arith.constant 0 : i32
    %251 = vector.broadcast %c0_i32_75 : i32 to vector<1x256xi32>
    %252 = arith.cmpi sge, %250, %251 : vector<1x256xi32>
    %c1_i32_76 = arith.constant 1 : i32
    %253 = vector.broadcast %c1_i32_76 : i32 to vector<1x256xi32>
    %254 = arith.addi %57, %253 : vector<1x256xi32>
    %c15_i32_77 = arith.constant 15 : i32
    %255 = vector.broadcast %c15_i32_77 : i32 to vector<1x256xi32>
    %256 = arith.cmpi sle, %254, %255 : vector<1x256xi32>
    %257 = arith.andi %252, %256 : vector<1x256xi1>
    %258 = arith.andi %204, %257 : vector<1x256xi1>
    %259 = arith.extui %258 : vector<1x256xi1> to vector<1x256xi32>
    %260 = arith.sitofp %259 : vector<1x256xi32> to vector<1x256xf32>
    %c8 = arith.constant 8 : index
    %261 = memref.load %arg3[%c8] : memref<18xf32, #tpu.memory_space<smem>>
    %c17 = arith.constant 17 : index
    %262 = memref.load %arg3[%c17] : memref<18xf32, #tpu.memory_space<smem>>
    %263 = vector.broadcast %261 : f32 to vector<1x256xf32>
    %264 = arith.mulf %263, %49 : vector<1x256xf32>
    %265 = vector.broadcast %262 : f32 to vector<1x256xf32>
    %266 = arith.mulf %265, %54 : vector<1x256xf32>
    %267 = arith.addf %264, %266 : vector<1x256xf32>
    %c239_i32 = arith.constant 239 : i32
    %268 = tpu.dynamic_rotate %267 by %c239_i32 dim 1 : vector<1x256xf32>, i32 -> vector<1x256xf32>
    %269 = arith.mulf %268, %260 : vector<1x256xf32>
    %270 = arith.addf %248, %269 : vector<1x256xf32>
    %c0_78 = arith.constant 0 : index
    %271 = memref.load %arg4[%c0_78] : memref<1xf32, #tpu.memory_space<smem>>
    %272 = vector.broadcast %271 : f32 to vector<1x256xf32>
    %273 = arith.addf %270, %272 : vector<1x256xf32>
    %274 = arith.negf %273 : vector<1x256xf32>
    %275 = math.exp %274 : vector<1x256xf32>
    %cst_79 = arith.constant 1.000000e+00 : f32
    %276 = vector.broadcast %cst_79 : f32 to vector<1x256xf32>
    %277 = arith.addf %276, %275 : vector<1x256xf32>
    %278 = arith.divf %276, %277 : vector<1x256xf32>
    %c0_i32_80 = arith.constant 0 : i32
    %c4_i32_81 = arith.constant 4 : i32
    %279 = arith.muli %c0_i32_80, %c4_i32_81 : i32
    %c0_82 = arith.constant 0 : index
    %280 = arith.index_cast %279 : i32 to index
    %c0_83 = arith.constant 0 : index
    %281 = vector.load %arg1[%c0_82, %280, %c0_83] : memref<1x4x256xf32, #tpu.memory_space<vmem>>, vector<1x4x256xf32>
    %282 = vector.shape_cast %281 : vector<1x4x256xf32> to vector<4x256xf32>
    %283 = arith.index_cast %279 : i32 to index
    %c0_84 = arith.constant 0 : index
    %284 = vector.load %arg7[%283, %c0_84] : memref<4x1xf32, #tpu.memory_space<vmem>>, vector<4x1xf32>
    %285 = vector.broadcast %278 : vector<1x256xf32> to vector<4x256xf32>
    %286 = vector.broadcast %284 : vector<4x1xf32> to vector<4x256xf32>
    %287 = arith.mulf %285, %286 : vector<4x256xf32>
    %288 = arith.mulf %282, %287 : vector<4x256xf32>
    %c0_85 = arith.constant 0 : index
    %289 = arith.index_cast %279 : i32 to index
    %c0_86 = arith.constant 0 : index
    %290 = vector.load %arg5[%c0_85, %289, %c0_86] : memref<1x4x256xf32, #tpu.memory_space<vmem>>, vector<1x4x256xf32>
    %291 = vector.shape_cast %290 : vector<1x4x256xf32> to vector<4x256xf32>
    %292 = vector.shape_cast %288 : vector<4x256xf32> to vector<1x4x256xf32>
    tpu.vector_store %arg5[%c0_85, %289, %c0_86], %292 {strides = array<i32>} : memref<1x4x256xf32, #tpu.memory_space<vmem>>, vector<1x4x256xf32>,
    %c1_i32_87 = arith.constant 1 : i32
    return
  }
  func.func @transform_0(%arg0: i32) -> (i32, i32, i32) {
    %c0_i32 = arith.constant 0 : i32
    %c0_i32_0 = arith.constant 0 : i32
    %c0_i32_1 = arith.constant 0 : i32
    return %arg0, %c0_i32, %c0_i32_0 : i32, i32, i32
  }
  func.func @transform_1(%arg0: i32) -> i32 {
    %c0_i32 = arith.constant 0 : i32
    %c0_i32_0 = arith.constant 0 : i32
    return %c0_i32 : i32
  }
  func.func @transform_2(%arg0: i32) -> i32 {
    %c0_i32 = arith.constant 0 : i32
    %c0_i32_0 = arith.constant 0 : i32
    return %c0_i32 : i32
  }
  func.func @transform_3(%arg0: i32) -> i32 {
    %c0_i32 = arith.constant 0 : i32
    %c0_i32_0 = arith.constant 0 : i32
    return %c0_i32 : i32
  }
  func.func @transform_4(%arg0: i32) -> (i32, i32, i32) {
    %c0_i32 = arith.constant 0 : i32
    %c0_i32_0 = arith.constant 0 : i32
    %c0_i32_1 = arith.constant 0 : i32
    return %arg0, %c0_i32, %c0_i32_0 : i32, i32, i32
  }
}

</mosaic_0001>

<llo_original>
// kernel: tpu_custom_call.1
$region0: #{tpu_custom_call.1}
  #allocation0 [shape = 'u32[]', space=smem, size = 0x4, offset = 0x4, fixed_abs, tag = 'smem constant byte address 0x4 - core index']
  #allocation1 [shape = 'u32[72,128]{1,0:T(1,128)}', space=vmem, size = 0x9000, scoped, tag = 'internal scratch']
  #allocation2 [shape = 'f32[6,1]{1,0:T(8,128)}', space=vmem, size = 0x1000, scoped, tag = 'scratch operand']
  #allocation3 [shape = 'f32[4,1]{1,0:T(4,128)}', space=vmem, size = 0x800, scoped, tag = 'scratch operand']
  #allocation4 [shape = 'f32[1]{0:T(128)S(6)}', space=smem, size = 0x200, scoped, tag = 'scoped memory for tpu_custom_call.1']
  %s0 = inlined_call_operand.hbm [shape: f32[2,4,256], index: 0, kind: input, shape index: {}]
  %s1 = inlined_call_operand.vmem [shape: f32[3], index: 1, kind: input, shape index: {}]
  %s2 = inlined_call_operand.vmem [shape: f32[18], index: 2, kind: input, shape index: {}]
  %s3 = inlined_call_operand.<no memory space> [shape: f32[1], index: 3, kind: input, shape index: {}]
  %s4 = inlined_call_operand.hbm [shape: f32[2,4,256], index: 4, kind: output, shape index: {}]
  %s5 = sld [smem:[#allocation0]]
  $region61: #{tpu_custom_call.1} parent=0
    _
  %s7 = ssub.s32 1, %s5
  %s8 = scalar_select 0, %s7, %s5
  %9 = sst [smem:[#allocation4]] %s3
  $region1: #{tpu_custom_call.1} parent=0
    #allocation5 [shape = 'u8[8192]{0}', space=vmem, size = 0x2000, scoped, tag = 'input window, operand 0']
    #allocation6 [shape = 's32[2]{0}', space=sflag, size = 0x8, scoped, tag = 'scoped memory for tpu_custom_call.1']
    #allocation7 [shape = 's32[2]{0}', space=sflag, size = 0x8, scoped, tag = 'scoped memory for tpu_custom_call.1']
    #allocation8 [shape = 's32[2]{0}', space=sflag, size = 0x8, scoped, tag = 'scoped memory for tpu_custom_call.1']
    #allocation9 [shape = 'u8[512]{0}', space=smem, size = 0x200, scoped, tag = 'input window, operand 1, single buffered']
    #allocation10 [shape = 'u8[512]{0}', space=smem, size = 0x200, scoped, tag = 'input window, operand 2, single buffered']
    #allocation11 [shape = 's32[1]{0}', space=sflag, size = 0x4, scoped, tag = 'scoped memory for tpu_custom_call.1']
    #allocation12 [shape = 'u8[8192]{0}', space=vmem, size = 0x2000, scoped, tag = 'output window, operand 0']
    %10 = vsyncpa [#allocation6], 0
    %s11 = scalar_lea.sflag [#allocation6], 1
    %12 = vsyncpa %s11, 0
    %13 = vsyncpa [#allocation8], 0
    %14 = vsyncpa [#allocation11], 0
    %15 = vsyncpa [#allocation7], 0
    %s16 = scalar_lea.sflag [#allocation7], 1
    %17 = vsyncpa %s16, 0
    loop: start=0, step=1, limit=4
    $region2: #{tpu_custom_call.1} parent=1 // loop_pre_header
      _
    $region3: #{tpu_custom_call.1} parent=1 // loop_header
      %s19 = sphi 0, %s23
      %p20 = scmp.ge.s32.totalorder %s19, 4
      %s29 = sphi 0, %s31
      %s32 = sphi 0, %s29
      %s33 = sphi 0, %s32
      %s49 = sphi 0, %s33
      %s53 = sphi 0, %s53
      %s55 = sphi 0, %s53
      %s56 = sphi 0, %s55
      %s70 = sphi 0, %s56
      %s74 = sphi 0, %s74
      %s76 = sphi 0, %s74
      %s77 = sphi 0, %s76
      %s91 = sphi 0, %s77
      %s95 = sphi 0, %s95
      %s97 = sphi 0, %s95
      %s98 = sphi 0, %s97
      %s112 = sphi 0, %s98
      %s118 = sphi 0, %s120
      %s121 = sphi 0, %s118
      %s122 = sphi 0, %s121
      %s138 = sphi 0, %s122
    $region4: #{tpu_custom_call.1} parent=1 // loop_header_branch
      %22 = sbr.rel (%p20) target = $region8
    $region5: #{tpu_custom_call.1} parent=1 // loop_body
      %s24 = ssub.s32 %s19, 1
      %s25 = ssub.s32 %s19, 2
      %s26 = sadd.s32 %s19, 1
      %s27 = ssub.s32 %s19, %s26
      %p28 = scmp.eq.s32.totalorder %s27, 0
      %s30 = sadd.s32 %s29, 1
      %s31 = scalar_select %p28, %s29, %s30
      %p34 = pneg %p28
      %p35 = scmp.eq.s32.totalorder %s19, 1
      %p36 = por %p34, %p35
      %p37 = scmp.ne.s32.totalorder %s29, %s32
      %p38 = scmp.eq.s32.totalorder %s19, 0
      %p39 = por %p37, %p38
      %p40 = scmp.ne.s32.totalorder %s29, %s32
      %p41 = scmp.eq.s32.totalorder %s24, 1
      %p42 = por %p40, %p41
      %p43 = scmp.ne.s32.totalorder %s32, %s33
      %p44 = scmp.eq.s32.totalorder %s24, 0
      %p45 = por %p43, %p44
      %p46 = scmp.ne.s32.totalorder %s32, %s33
      %p47 = scmp.eq.s32.totalorder %s25, 1
      %p48 = por %p46, %p47
      %p50 = scmp.ne.s32.totalorder %s33, %s49
      %p51 = scmp.eq.s32.totalorder %s25, 0
      %p52 = por %p50, %p51
      %s54 = sadd.s32 %s53, 1
      %p57 = scmp.eq.s32.totalorder %s19, 1
      %p58 = scmp.ne.s32.totalorder %s53, %s55
      %p59 = scmp.eq.s32.totalorder %s19, 0
      %p60 = por %p58, %p59
      %p61 = scmp.ne.s32.totalorder %s53, %s55
      %p62 = scmp.eq.s32.totalorder %s24, 1
      %p63 = por %p61, %p62
      %p64 = scmp.ne.s32.totalorder %s55, %s56
      %p65 = scmp.eq.s32.totalorder %s24, 0
      %p66 = por %p64, %p65
      %p67 = scmp.ne.s32.totalorder %s55, %s56
      %p68 = scmp.eq.s32.totalorder %s25, 1
      %p69 = por %p67, %p68
      %p71 = scmp.ne.s32.totalorder %s56, %s70
      %p72 = scmp.eq.s32.totalorder %s25, 0
      %p73 = por %p71, %p72
      %s75 = sadd.s32 %s74, 1
      %p78 = scmp.eq.s32.totalorder %s19, 1
      %p79 = scmp.ne.s32.totalorder %s74, %s76
      %p80 = scmp.eq.s32.totalorder %s19, 0
      %p81 = por %p79, %p80
      %p82 = scmp.ne.s32.totalorder %s74, %s76
      %p83 = scmp.eq.s32.totalorder %s24, 1
      %p84 = por %p82, %p83
      %p85 = scmp.ne.s32.totalorder %s76, %s77
      %p86 = scmp.eq.s32.totalorder %s24, 0
      %p87 = por %p85, %p86
      %p88 = scmp.ne.s32.totalorder %s76, %s77
      %p89 = scmp.eq.s32.totalorder %s25, 1
      %p90 = por %p88, %p89
      %p92 = scmp.ne.s32.totalorder %s77, %s91
      %p93 = scmp.eq.s32.totalorder %s25, 0
      %p94 = por %p92, %p93
      %s96 = sadd.s32 %s95, 1
      %p99 = scmp.eq.s32.totalorder %s19, 1
      %p100 = scmp.ne.s32.totalorder %s95, %s97
      %p101 = scmp.eq.s32.totalorder %s19, 0
      %p102 = por %p100, %p101
      %p103 = scmp.ne.s32.totalorder %s95, %s97
      %p104 = scmp.eq.s32.totalorder %s24, 1
      %p105 = por %p103, %p104
      %p106 = scmp.ne.s32.totalorder %s97, %s98
      %p107 = scmp.eq.s32.totalorder %s24, 0
      %p108 = por %p106, %p107
      %p109 = scmp.ne.s32.totalorder %s97, %s98
      %p110 = scmp.eq.s32.totalorder %s25, 1
      %p111 = por %p109, %p110
      %p113 = scmp.ne.s32.totalorder %s98, %s112
      %p114 = scmp.eq.s32.totalorder %s25, 0
      %p115 = por %p113, %p114
      %s116 = ssub.s32 %s19, %s26
      %p117 = scmp.eq.s32.totalorder %s116, 0
      %s119 = sadd.s32 %s118, 1
      %s120 = scalar_select %p117, %s118, %s119
      %p123 = pneg %p117
      %p124 = scmp.eq.s32.totalorder %s19, 1
      %p125 = por %p123, %p124
      %p126 = scmp.ne.s32.totalorder %s118, %s121
      %p127 = scmp.eq.s32.totalorder %s19, 0
      %p128 = por %p126, %p127
      %p129 = scmp.ne.s32.totalorder %s118, %s121
      %p130 = scmp.eq.s32.totalorder %s24, 1
      %p131 = por %p129, %p130
      %p132 = scmp.ne.s32.totalorder %s121, %s122
      %p133 = scmp.eq.s32.totalorder %s24, 0
      %p134 = por %p132, %p133
      %p135 = scmp.ne.s32.totalorder %s121, %s122
      %p136 = scmp.eq.s32.totalorder %s25, 1
      %p137 = por %p135, %p136
      %p139 = scmp.ne.s32.totalorder %s122, %s138
      %p140 = scmp.eq.s32.totalorder %s25, 0
      %p141 = por %p139, %p140
      %p142 = scmp.le.s32.totalorder 1, %s19
      %p143 = scmp.lt.s32.totalorder %s19, 3
      %p144 = pnand %p142, %p143
      %p145 = pneg %p144
      // Predicated region
      $region9: #{tpu_custom_call.1} parent=5 // pred_check
        _
      $region10: #{tpu_custom_call.1} parent=5 // pred_check_branch
        %147 = sbr.rel (%p144) target = $region12
      $region11: #{tpu_custom_call.1} parent=5 // pred_region
        %s148 = ssub.s32 %s19, 1
        // Predicated region
        $region13: #{tpu_custom_call.1} parent=11 // pred_check
          %p149 = pneg %p66
        $region14: #{tpu_custom_call.1} parent=11 // pred_check_branch
          %151 = sbr.rel (%p149) target = $region16
        $region15: #{tpu_custom_call.1} parent=11 // pred_region
          %153 = vsyncadd [#allocation8], 0
          %s155 = sshll.u32 %s1, 4
          %s156 = int_to_ptr.vmem [resolvable:$true] %s155
          %158 = dma.vmem_to_smem %s156, 16, [#allocation9], [#allocation8]
        $region16: #{tpu_custom_call.1} parent=11 // pred_fallthru
          _
        // Predicated region
        $region17: #{tpu_custom_call.1} parent=11 // pred_check
          %p159 = pneg %p87
        $region18: #{tpu_custom_call.1} parent=11 // pred_check_branch
          %161 = sbr.rel (%p159) target = $region20
        $region19: #{tpu_custom_call.1} parent=11 // pred_region
          %163 = vsyncadd [#allocation11], 0
          %s165 = sshll.u32 %s2, 4
          %s166 = int_to_ptr.vmem [resolvable:$true] %s165
          %168 = dma.vmem_to_smem %s166, 16, [#allocation10], [#allocation11]
        $region20: #{tpu_custom_call.1} parent=11 // pred_fallthru
          _
        // Predicated region
        $region21: #{tpu_custom_call.1} parent=11 // pred_check
          %p169 = pneg %p108
        $region22: #{tpu_custom_call.1} parent=11 // pred_check_branch
          %171 = sbr.rel (%p169) target = $region24
        $region23: #{tpu_custom_call.1} parent=11 // pred_region
          _
        $region24: #{tpu_custom_call.1} parent=11 // pred_fallthru
          _
      $region12: #{tpu_custom_call.1} parent=5 // pred_fallthru
        _
      %p172 = scmp.lt.s32.totalorder %s19, 2
      // Predicated region
      $region25: #{tpu_custom_call.1} parent=5 // pred_check
        %p173 = pneg %p172
      $region26: #{tpu_custom_call.1} parent=5 // pred_check_branch
        %175 = sbr.rel (%p173) target = $region28
      $region27: #{tpu_custom_call.1} parent=5 // pred_region
        // Predicated region
        $region29: #{tpu_custom_call.1} parent=27 // pred_check
          %p176 = pneg %p39
        $region30: #{tpu_custom_call.1} parent=27 // pred_check_branch
          %178 = sbr.rel (%p176) target = $region32
        $region31: #{tpu_custom_call.1} parent=27 // pred_region
          %s179 = sand.u32 %s29, 1
          %s180 = scalar_lea.sflag [#allocation6], %s179
          %s181 = sand.u32 %s29, 1
          %s182 = smul.addr %s181, 8
          %s183 = scalar_lea.vmem [#allocation5], %s182
          %185 = vsyncadd %s180, 0
          %s186 = smul.addr %s19, 2
          %s187 = smul.addr %s186, 4
          %s188 = scalar_lea.hbm %s0, %s187
          %s190 = sshll.u32 %s188, 4
          %s191 = int_to_ptr.hbm [resolvable:$true] %s190
          %s192 = sshll.u32 %s183, 4
          %s193 = int_to_ptr.vmem [resolvable:$true] %s192
          %195 = dma.hbm_to_vmem [thread:$0]  %s191, 128, %s193, %s180
        $region32: #{tpu_custom_call.1} parent=27 // pred_fallthru
          _
      $region28: #{tpu_custom_call.1} parent=5 // pred_fallthru
        _
      %p196 = scmp.le.s32.totalorder 1, %s19
      %p197 = scmp.lt.s32.totalorder %s19, 3
      %p198 = pnand %p196, %p197
      %p199 = pneg %p198
      // Predicated region
      $region33: #{tpu_custom_call.1} parent=5 // pred_check
        _
      $region34: #{tpu_custom_call.1} parent=5 // pred_check_branch
        %201 = sbr.rel (%p198) target = $region36
      $region35: #{tpu_custom_call.1} parent=5 // pred_region
        %s202 = ssub.s32 %s19, 1
        %s203 = sand.u32 %s32, 1
        %s204 = scalar_lea.sflag [#allocation6], %s203
        %s205 = sand.u32 %s32, 1
        %s206 = smul.addr %s205, 8
        %s207 = scalar_lea.vmem [#allocation5], %s206
        // Predicated region
        $region37: #{tpu_custom_call.1} parent=35 // pred_check
          %p208 = pneg %p45
        $region38: #{tpu_custom_call.1} parent=35 // pred_check_branch
          %210 = sbr.rel (%p208) target = $region40
        $region39: #{tpu_custom_call.1} parent=35 // pred_region
          %212 = dma.done %s204, 128
        $region40: #{tpu_custom_call.1} parent=35 // pred_fallthru
          _
        // Predicated region
        $region41: #{tpu_custom_call.1} parent=35 // pred_check
          %p213 = pneg %p66
        $region42: #{tpu_custom_call.1} parent=35 // pred_check_branch
          %215 = sbr.rel (%p213) target = $region44
        $region43: #{tpu_custom_call.1} parent=35 // pred_region
          %217 = dma.done [#allocation8], 16
        $region44: #{tpu_custom_call.1} parent=35 // pred_fallthru
          _
        // Predicated region
        $region45: #{tpu_custom_call.1} parent=35 // pred_check
          %p218 = pneg %p87
        $region46: #{tpu_custom_call.1} parent=35 // pred_check_branch
          %220 = sbr.rel (%p218) target = $region48
        $region47: #{tpu_custom_call.1} parent=35 // pred_region
          %222 = dma.done [#allocation11], 16
        $region48: #{tpu_custom_call.1} parent=35 // pred_fallthru
          _
        %223 = sfence
        %s224 = sand.u32 %s32, 1
        %s225 = scalar_lea.sflag [#allocation6], %s224
        %s226 = sand.u32 %s32, 1
        %s227 = smul.addr %s226, 8
        %s228 = scalar_lea.vmem [#allocation5], %s227
        %p229 = pneg %p45
        %p230 = pneg %p42
        %p231 = pneg %p66
        %p232 = pneg %p63
        %p233 = pneg %p87
        %p234 = pneg %p84
        %p235 = pneg %p108
        %p236 = pneg %p105
        %p237 = pneg %p134
        %p238 = pneg %p131
        %s239 = sand.u32 %s121, 1
        %s240 = scalar_lea.sflag [#allocation7], %s239
        %s241 = sand.u32 %s121, 1
        %s242 = smul.addr %s241, 8
        %s243 = scalar_lea.vmem [#allocation12], %s242
        %vm244 = vcmask 0
        %245 = vst.msk [vmem:[#allocation2] sm:$0x1] %vm244, 0.0
        %246 = vst.msk [vmem:[#allocation2 + $0x5] sm:$0x1] %vm244, 0.0
        %v247 = vld [vmem:[%s207] sm:$0xff]
        %249 = vst [vmem:[#allocation1] ss:$2 sm:$0xff] %v247
        %v250 = vld.sshfl [vmem:[#allocation1] sm:$0xff pattern:$0x75316420]
        %v251 = vld.sshfl [vmem:[#allocation1 + $0x8] sm:$0xff pattern:$0x75316420]
        %vm254 = vcmask 1043456
        %v255 = vsel %vm254, %v250, 0.0
        %v256 = vsel %vm254, %v251, 0.0
        %v257 = vadd.f32 %v255, %v256
        %258 = vadd.xlane.f32.xlu0 %v257
        %v259 = vpop.xlane.xlu0 %258
        %v260 = vmul.f32 %v259, 0.00390625
        %vm261 = vcmask 3072
        %262 = vst.msk [vmem:[#allocation2 + $0x1] sm:$0xf] %vm261, %v260
        %s263 = sld [smem:[#allocation9]]
        %v264 = vld [vmem:[#allocation2] sm:$0xf]
        %v265 = vstv %s263
        %v266 = vmul.f32 %v265, %v264
        %v267 = vadd.f32 %v266, 0.0
        %s268 = sld [smem:[#allocation9 + $0x1]]
        %v269 = vld [vmem:[#allocation2 + $0x1] sm:$0xf]
        %v270 = vstv %s268
        %v271 = vmul.f32 %v270, %v269
        %v272 = vadd.f32 %v267, %v271
        %s273 = sld [smem:[#allocation9 + $0x2]]
        %v274 = vld [vmem:[#allocation2 + $0x2] sm:$0xf]
        %v275 = vstv %s273
        %v276 = vmul.f32 %v275, %v274
        %v277 = vadd.f32 %v272, %v276
        %v278 = vxor.u32 %v277, 2147483648
        %v279 = vmul.f32 %v278, 1.442695
        %v280 = vpow.pop %v279
        %v281 = vadd.f32 %v280, 1.0
        %v282 = vrcp.pop %v281
        %v283 = vmul.f32 %v281, %v282
        %v284 = vsub.f32 1.0, %v283
        %v285 = vmul.f32 %v282, %v284
        %v286 = vadd.f32 %v282, %v285
        %vm287 = vweird.f32 %v281
        %vm288 = vweird.f32 %v282
        %vm289 = vmor %vm287, %vm288
        %v290 = vsel %vm289, %v282, %v286
        %v291 = vand.u32 2147483647, %v281
        %vm292 = vcmp.eq.f32.partialorder %v291, 8.507059e+37
        %v293 = vand.u32 %v281, 2147483648
        %v294 = vor.u32 1.1754944e-38, %v293
        %v295 = vsel %vm292, %v294, %v290
        %v296 = vmul.f32 1.0, %v295
        %297 = vst.msk [vmem:[#allocation3] sm:$0xf] %vm261, %v296
        %v298 = vld [vmem:[%s207] sm:$0xff]
        %v299 = vld [vmem:[#allocation3] sm:$0xf]
        %301 = vset.pattern.permute.xlu0 0
        %302 = vperm.xlu0 %301, %v299
        %v303 = vpop.permute.xlu0 %302
        %v306 = vunpack.c.l.s4 839922192
        %v307 = vunpack.c.0.s8 %v306
        %v308 = vperm.slane %v303, %v307
        %v310 = vmul.f32 %v298, %v308
        %312 = vst [vmem:[#allocation1] ss:$2 sm:$0xff] %v310
        %v313 = vld.sshfl [vmem:[#allocation1] sm:$0xff pattern:$0x75316420]
        %v314 = vld.sshfl [vmem:[#allocation1 + $0x8] sm:$0xff pattern:$0x75316420]
        %v317 = vsel %vm254, %v313, -inf
        %v318 = vrot.slane %v317, 4
        %v319 = vmax.f32 %v317, %v318
        %v320 = vrot.slane %v319, 2
        %v321 = vmax.f32 %v319, %v320
        %v322 = vrot.slane %v321, 1
        %v323 = vmax.f32 %v321, %v322
        %v324 = vsel %vm254, %v314, -inf
        %v325 = vrot.slane %v324, 4
        %v326 = vmax.f32 %v324, %v325
        %v327 = vrot.slane %v326, 2
        %v328 = vmax.f32 %v326, %v327
        %v329 = vrot.slane %v328, 1
        %v330 = vmax.f32 %v328, %v329
        %331 = vst [vmem:[#allocation1] ss:$2 sm:$0xff] %v310
        %v332 = vld.sshfl [vmem:[#allocation1] sm:$0xff pattern:$0x75316420]
        %v333 = vld.sshfl [vmem:[#allocation1 + $0x8] sm:$0xff pattern:$0x75316420]
        %v336 = vsel %vm254, %v332, 0.0
        %v337 = vrot.slane %v336, 4
        %v338 = vadd.f32 %v336, %v337
        %v339 = vrot.slane %v338, 2
        %v340 = vadd.f32 %v338, %v339
        %v341 = vrot.slane %v340, 1
        %v342 = vadd.f32 %v340, %v341
        %v343 = vsel %vm254, %v333, 0.0
        %v344 = vrot.slane %v343, 4
        %v345 = vadd.f32 %v343, %v344
        %v346 = vrot.slane %v345, 2
        %v347 = vadd.f32 %v345, %v346
        %v348 = vrot.slane %v347, 1
        %v349 = vadd.f32 %v347, %v348
        %v350 = vadd.f32 %v342, 0.0
        %v351 = vadd.f32 %v349, 0.0
        %v352 = vmul.f32 %v350, 0.25
        %v353 = vmul.f32 %v351, 0.25
        %v354 = vlaneseq
        %v355 = vand.u32 %v354, 127
        %v356 = vadd.s32 %v355, 128
        %v357 = vand.u32 %v355, 15
        %v358 = vand.u32 %v356, 15
        %vm359 = vcmp.ge.s32.totalorder %v355, 16
        %vm360 = vcmp.ge.s32.totalorder %v356, 16
        %vm361 = vcmp.lt.s32.totalorder %v355, 256
        %vm362 = vcmp.lt.s32.totalorder %v356, 256
        %vm363 = vmand %vm359, %vm361
        %vm364 = vmand %vm360, %vm362
        %v365 = vadd.s32 %v357, 4294967295
        %v366 = vadd.s32 %v358, 4294967295
        %vm367 = vcmp.ge.s32.totalorder %v365, 0
        %vm368 = vcmp.ge.s32.totalorder %v366, 0
        %vm369 = vcmp.le.s32.totalorder %v365, 15
        %vm370 = vcmp.le.s32.totalorder %v366, 15
        %vm371 = vmand %vm367, %vm369
        %vm372 = vmand %vm368, %vm370
        %vm373 = vmand %vm363, %vm371
        %vm374 = vmand %vm364, %vm372
        %v375 = vsel %vm373, 1, 0
        %v376 = vsel %vm374, 1, 0
        %v377 = vcvt.s32.f32 %v375
        %v378 = vcvt.s32.f32 %v376
        %s379 = sld [smem:[#allocation10]]
        %s380 = sld [smem:[#allocation10 + $0x9]]
        %v381 = vstv %s379
        %v382 = vmul.f32 %v381, %v323
        %v383 = vmul.f32 %v381, %v330
        %v384 = vstv %s380
        %v385 = vmul.f32 %v384, %v352
        %v386 = vmul.f32 %v384, %v353
        %v387 = vadd.f32 %v382, %v385
        %v388 = vadd.f32 %v383, %v386
        %389 = vrot.lane.b32.xlu0 %v387, 17
        %v390 = vpop.permute.xlu0 %389
        %391 = vrot.lane.b32.xlu0 %v388, 17
        %v392 = vpop.permute.xlu0 %391
        %vm393 = vcmp.lt.s32.totalorder %v355, 17
        %v394 = vsel %vm393, %v390, %v392
        %v395 = vsel %vm393, %v392, %v390
        %v396 = vmul.f32 %v395, %v377
        %v397 = vmul.f32 %v394, %v378
        %v398 = vadd.f32 %v396, 0.0
        %v399 = vadd.f32 %v397, 0.0
        %vm400 = vcmp.ge.s32.totalorder %v357, 0
        %vm401 = vcmp.ge.s32.totalorder %v358, 0
        %vm402 = vcmp.le.s32.totalorder %v357, 15
        %vm403 = vcmp.le.s32.totalorder %v358, 15
        %vm404 = vmand %vm400, %vm402
        %vm405 = vmand %vm401, %vm403
        %vm406 = vmand %vm363, %vm404
        %vm407 = vmand %vm364, %vm405
        %v408 = vsel %vm406, 1, 0
        %v409 = vsel %vm407, 1, 0
        %v410 = vcvt.s32.f32 %v408
        %v411 = vcvt.s32.f32 %v409
        %s412 = sld [smem:[#allocation10 + $0x1]]
        %s413 = sld [smem:[#allocation10 + $0xa]]
        %v414 = vstv %s412
        %v415 = vmul.f32 %v414, %v323
        %v416 = vmul.f32 %v414, %v330
        %v417 = vstv %s413
        %v418 = vmul.f32 %v417, %v352
        %v419 = vmul.f32 %v417, %v353
        %v420 = vadd.f32 %v415, %v418
        %v421 = vadd.f32 %v416, %v419
        %422 = vrot.lane.b32.xlu0 %v420, 16
        %v423 = vpop.permute.xlu0 %422
        %424 = vrot.lane.b32.xlu0 %v421, 16
        %v425 = vpop.permute.xlu0 %424
        %vm426 = vcmp.lt.s32.totalorder %v355, 16
        %v427 = vsel %vm426, %v423, %v425
        %v428 = vsel %vm426, %v425, %v423
        %v429 = vmul.f32 %v428, %v410
        %v430 = vmul.f32 %v427, %v411
        %v431 = vadd.f32 %v398, %v429
        %v432 = vadd.f32 %v399, %v430
        %v433 = vadd.s32 %v357, 1
        %v434 = vadd.s32 %v358, 1
        %vm435 = vcmp.ge.s32.totalorder %v433, 0
        %vm436 = vcmp.ge.s32.totalorder %v434, 0
        %vm437 = vcmp.le.s32.totalorder %v433, 15
        %vm438 = vcmp.le.s32.totalorder %v434, 15
        %vm439 = vmand %vm435, %vm437
        %vm440 = vmand %vm436, %vm438
        %vm441 = vmand %vm363, %vm439
        %vm442 = vmand %vm364, %vm440
        %v443 = vsel %vm441, 1, 0
        %v444 = vsel %vm442, 1, 0
        %v445 = vcvt.s32.f32 %v443
        %v446 = vcvt.s32.f32 %v444
        %s447 = sld [smem:[#allocation10 + $0x2]]
        %s448 = sld [smem:[#allocation10 + $0xb]]
        %v449 = vstv %s447
        %v450 = vmul.f32 %v449, %v323
        %v451 = vmul.f32 %v449, %v330
        %v452 = vstv %s448
        %v453 = vmul.f32 %v452, %v352
        %v454 = vmul.f32 %v452, %v353
        %v455 = vadd.f32 %v450, %v453
        %v456 = vadd.f32 %v451, %v454
        %457 = vrot.lane.b32.xlu0 %v455, 15
        %v458 = vpop.permute.xlu0 %457
        %459 = vrot.lane.b32.xlu0 %v456, 15
        %v460 = vpop.permute.xlu0 %459
        %vm461 = vcmp.lt.s32.totalorder %v355, 15
        %v462 = vsel %vm461, %v458, %v460
        %v463 = vsel %vm461, %v460, %v458
        %v464 = vmul.f32 %v463, %v445
        %v465 = vmul.f32 %v462, %v446
        %v466 = vadd.f32 %v431, %v464
        %v467 = vadd.f32 %v432, %v465
        %vm468 = vcmp.ge.s32.totalorder %v355, 0
        %vm469 = vcmp.ge.s32.totalorder %v356, 0
        %vm470 = vmand %vm468, %vm361
        %vm471 = vmand %vm469, %vm362
        %vm472 = vmand %vm470, %vm371
        %vm473 = vmand %vm471, %vm372
        %v474 = vsel %vm472, 1, 0
        %v475 = vsel %vm473, 1, 0
        %v476 = vcvt.s32.f32 %v474
        %v477 = vcvt.s32.f32 %v475
        %s478 = sld [smem:[#allocation10 + $0x3]]
        %s479 = sld [smem:[#allocation10 + $0xc]]
        %v480 = vstv %s478
        %v481 = vmul.f32 %v480, %v323
        %v482 = vmul.f32 %v480, %v330
        %v483 = vstv %s479
        %v484 = vmul.f32 %v483, %v352
        %v485 = vmul.f32 %v483, %v353
        %v486 = vadd.f32 %v481, %v484
        %v487 = vadd.f32 %v482, %v485
        %488 = vrot.lane.b32.xlu0 %v486, 1
        %v489 = vpop.permute.xlu0 %488
        %490 = vrot.lane.b32.xlu0 %v487, 1
        %v491 = vpop.permute.xlu0 %490
        %vm492 = vcmp.lt.s32.totalorder %v355, 1
        %v493 = vsel %vm492, %v489, %v491
        %v494 = vsel %vm492, %v491, %v489
        %v495 = vmul.f32 %v494, %v476
        %v496 = vmul.f32 %v493, %v477
        %v497 = vadd.f32 %v466, %v495
        %v498 = vadd.f32 %v467, %v496
        %vm499 = vmand %vm470, %vm404
        %vm500 = vmand %vm471, %vm405
        %v501 = vsel %vm499, 1, 0
        %v502 = vsel %vm500, 1, 0
        %v503 = vcvt.s32.f32 %v501
        %v504 = vcvt.s32.f32 %v502
        %s505 = sld [smem:[#allocation10 + $0x4]]
        %s506 = sld [smem:[#allocation10 + $0xd]]
        %v507 = vstv %s505
        %v508 = vmul.f32 %v507, %v323
        %v509 = vmul.f32 %v507, %v330
        %v510 = vstv %s506
        %v511 = vmul.f32 %v510, %v352
        %v512 = vmul.f32 %v510, %v353
        %v513 = vadd.f32 %v508, %v511
        %v514 = vadd.f32 %v509, %v512
        %v515 = vmul.f32 %v513, %v503
        %v516 = vmul.f32 %v514, %v504
        %v517 = vadd.f32 %v497, %v515
        %v518 = vadd.f32 %v498, %v516
        %vm519 = vmand %vm470, %vm439
        %vm520 = vmand %vm471, %vm440
        %v521 = vsel %vm519, 1, 0
        %v522 = vsel %vm520, 1, 0
        %v523 = vcvt.s32.f32 %v521
        %v524 = vcvt.s32.f32 %v522
        %s525 = sld [smem:[#allocation10 + $0x5]]
        %s526 = sld [smem:[#allocation10 + $0xe]]
        %v527 = vstv %s525
        %v528 = vmul.f32 %v527, %v323
        %v529 = vmul.f32 %v527, %v330
        %v530 = vstv %s526
        %v531 = vmul.f32 %v530, %v352
        %v532 = vmul.f32 %v530, %v353
        %v533 = vadd.f32 %v528, %v531
        %v534 = vadd.f32 %v529, %v532
        %535 = vrot.lane.b32.xlu0 %v533, 127
        %v536 = vpop.permute.xlu0 %535
        %537 = vrot.lane.b32.xlu0 %v534, 127
        %v538 = vpop.permute.xlu0 %537
        %vm539 = vcmp.lt.s32.totalorder %v355, 127
        %v540 = vsel %vm539, %v536, %v538
        %v541 = vsel %vm539, %v538, %v536
        %v542 = vmul.f32 %v540, %v523
        %v543 = vmul.f32 %v541, %v524
        %v544 = vadd.f32 %v517, %v542
        %v545 = vadd.f32 %v518, %v543
        %vm546 = vcmp.lt.s32.totalorder %v355, 240
        %vm547 = vcmp.lt.s32.totalorder %v356, 240
        %vm548 = vmand %vm468, %vm546
        %vm549 = vmand %vm469, %vm547
        %vm550 = vmand %vm548, %vm371
        %vm551 = vmand %vm549, %vm372
        %v552 = vsel %vm550, 1, 0
        %v553 = vsel %vm551, 1, 0
        %v554 = vcvt.s32.f32 %v552
        %v555 = vcvt.s32.f32 %v553
        %s556 = sld [smem:[#allocation10 + $0x6]]
        %s557 = sld [smem:[#allocation10 + $0xf]]
        %v558 = vstv %s556
        %v559 = vmul.f32 %v558, %v323
        %v560 = vmul.f32 %v558, %v330
        %v561 = vstv %s557
        %v562 = vmul.f32 %v561, %v352
        %v563 = vmul.f32 %v561, %v353
        %v564 = vadd.f32 %v559, %v562
        %v565 = vadd.f32 %v560, %v563
        %566 = vrot.lane.b32.xlu0 %v564, 113
        %v567 = vpop.permute.xlu0 %566
        %568 = vrot.lane.b32.xlu0 %v565, 113
        %v569 = vpop.permute.xlu0 %568
        %vm570 = vcmp.lt.s32.totalorder %v355, 113
        %v571 = vsel %vm570, %v567, %v569
        %v572 = vsel %vm570, %v569, %v567
        %v573 = vmul.f32 %v571, %v554
        %v574 = vmul.f32 %v572, %v555
        %v575 = vadd.f32 %v544, %v573
        %v576 = vadd.f32 %v545, %v574
        %vm577 = vmand %vm548, %vm404
        %vm578 = vmand %vm549, %vm405
        %v579 = vsel %vm577, 1, 0
        %v580 = vsel %vm578, 1, 0
        %v581 = vcvt.s32.f32 %v579
        %v582 = vcvt.s32.f32 %v580
        %s583 = sld [smem:[#allocation10 + $0x7]]
        %s584 = sld [smem:[#allocation10 + $0x10]]
        %v585 = vstv %s583
        %v586 = vmul.f32 %v585, %v323
        %v587 = vmul.f32 %v585, %v330
        %v588 = vstv %s584
        %v589 = vmul.f32 %v588, %v352
        %v590 = vmul.f32 %v588, %v353
        %v591 = vadd.f32 %v586, %v589
        %v592 = vadd.f32 %v587, %v590
        %593 = vrot.lane.b32.xlu0 %v591, 112
        %v594 = vpop.permute.xlu0 %593
        %595 = vrot.lane.b32.xlu0 %v592, 112
        %v596 = vpop.permute.xlu0 %595
        %vm597 = vcmp.lt.s32.totalorder %v355, 112
        %v598 = vsel %vm597, %v594, %v596
        %v599 = vsel %vm597, %v596, %v594
        %v600 = vmul.f32 %v598, %v581
        %v601 = vmul.f32 %v599, %v582
        %v602 = vadd.f32 %v575, %v600
        %v603 = vadd.f32 %v576, %v601
        %vm604 = vmand %vm548, %vm439
        %vm605 = vmand %vm549, %vm440
        %v606 = vsel %vm604, 1, 0
        %v607 = vsel %vm605, 1, 0
        %v608 = vcvt.s32.f32 %v606
        %v609 = vcvt.s32.f32 %v607
        %s610 = sld [smem:[#allocation10 + $0x8]]
        %s611 = sld [smem:[#allocation10 + $0x11]]
        %v612 = vstv %s610
        %v613 = vmul.f32 %v612, %v323
        %v614 = vmul.f32 %v612, %v330
        %v615 = vstv %s611
        %v616 = vmul.f32 %v615, %v352
        %v617 = vmul.f32 %v615, %v353
        %v618 = vadd.f32 %v613, %v616
        %v619 = vadd.f32 %v614, %v617
        %620 = vrot.lane.b32.xlu0 %v618, 111
        %v621 = vpop.permute.xlu0 %620
        %622 = vrot.lane.b32.xlu0 %v619, 111
        %v623 = vpop.permute.xlu0 %622
        %vm624 = vcmp.lt.s32.totalorder %v355, 111
        %v625 = vsel %vm624, %v621, %v623
        %v626 = vsel %vm624, %v623, %v621
        %v627 = vmul.f32 %v625, %v608
        %v628 = vmul.f32 %v626, %v609
        %v629 = vadd.f32 %v602, %v627
        %v630 = vadd.f32 %v603, %v628
        %s631 = sld [smem:[#allocation4]]
        %v632 = vstv %s631
        %v633 = vadd.f32 %v629, %v632
        %v634 = vadd.f32 %v630, %v632
        %v635 = vxor.u32 %v633, 2147483648
        %v636 = vxor.u32 %v634, 2147483648
        %v637 = vmul.f32 %v635, 1.442695
        %v638 = vpow.pop %v637
        %v639 = vmul.f32 %v636, 1.442695
        %v640 = vpow.pop %v639
        %v641 = vadd.f32 %v638, 1.0
        %v642 = vadd.f32 %v640, 1.0
        %v643 = vrcp.pop %v641
        %v644 = vmul.f32 %v641, %v643
        %v645 = vsub.f32 1.0, %v644
        %v646 = vmul.f32 %v643, %v645
        %v647 = vadd.f32 %v643, %v646
        %vm648 = vweird.f32 %v641
        %vm649 = vweird.f32 %v643
        %vm650 = vmor %vm648, %vm649
        %v651 = vsel %vm650, %v643, %v647
        %v652 = vand.u32 2147483647, %v641
        %vm653 = vcmp.eq.f32.partialorder %v652, 8.507059e+37
        %v654 = vand.u32 %v641, 2147483648
        %v655 = vor.u32 1.1754944e-38, %v654
        %v656 = vsel %vm653, %v655, %v651
        %v657 = vmul.f32 1.0, %v656
        %v658 = vrcp.pop %v642
        %v659 = vmul.f32 %v642, %v658
        %v660 = vsub.f32 1.0, %v659
        %v661 = vmul.f32 %v658, %v660
        %v662 = vadd.f32 %v658, %v661
        %vm663 = vweird.f32 %v642
        %vm664 = vweird.f32 %v658
        %vm665 = vmor %vm663, %vm664
        %v666 = vsel %vm665, %v658, %v662
        %v667 = vand.u32 2147483647, %v642
        %vm668 = vcmp.eq.f32.partialorder %v667, 8.507059e+37
        %v669 = vand.u32 %v642, 2147483648
        %v670 = vor.u32 1.1754944e-38, %v669
        %v671 = vsel %vm668, %v670, %v666
        %v672 = vmul.f32 1.0, %v671
        %v673 = vperm.slane %v657, 0
        %v674 = vperm.slane %v672, 0
        %v675 = vmul.f32 %v673, %v303
        %v676 = vmul.f32 %v674, %v303
        %v679 = vrot.slane %v676, 4
        %v680 = vsel %vm254, %v675, %v679
        %v682 = vmul.f32 %v298, %v680
        %683 = vst [vmem:[%s243] sm:$0xff] %v682
        %s684 = sand.u32 %s121, 1
        %s685 = scalar_lea.sflag [#allocation7], %s684
        %s686 = sand.u32 %s121, 1
        %s687 = smul.addr %s686, 8
        %s688 = scalar_lea.vmem [#allocation12], %s687
        // Predicated region
        $region49: #{tpu_custom_call.1} parent=35 // pred_check
          %p689 = pneg %p131
        $region50: #{tpu_custom_call.1} parent=35 // pred_check_branch
          %691 = sbr.rel (%p689) target = $region52
        $region51: #{tpu_custom_call.1} parent=35 // pred_region
          %693 = vsyncadd %s685, 0
          %s694 = smul.addr %s24, 2
          %s695 = smul.addr %s694, 4
          %s696 = scalar_lea.hbm %s4, %s695
          %s698 = sshll.u32 %s688, 4
          %s699 = int_to_ptr.vmem [resolvable:$true] %s698
          %s700 = sshll.u32 %s696, 4
          %s701 = int_to_ptr.hbm [resolvable:$true] %s700
          %703 = dma.vmem_to_hbm [thread:$0]  %s699, 128, %s701, %s685
        $region52: #{tpu_custom_call.1} parent=35 // pred_fallthru
          _
      $region36: #{tpu_custom_call.1} parent=5 // pred_fallthru
        _
      %p704 = scmp.le.s32.totalorder 2, %s19
      // Predicated region
      $region53: #{tpu_custom_call.1} parent=5 // pred_check
        %p705 = pneg %p704
      $region54: #{tpu_custom_call.1} parent=5 // pred_check_branch
        %707 = sbr.rel (%p705) target = $region56
      $region55: #{tpu_custom_call.1} parent=5 // pred_region
        %s708 = ssub.s32 %s19, 2
        // Predicated region
        $region57: #{tpu_custom_call.1} parent=55 // pred_check
          %p709 = pneg %p137
        $region58: #{tpu_custom_call.1} parent=55 // pred_check_branch
          %711 = sbr.rel (%p709) target = $region60
        $region59: #{tpu_custom_call.1} parent=55 // pred_region
          %s712 = sand.u32 %s122, 1
          %s713 = scalar_lea.sflag [#allocation7], %s712
          %s714 = sand.u32 %s122, 1
          %s715 = smul.addr %s714, 8
          %s716 = scalar_lea.vmem [#allocation12], %s715
          %718 = dma.done %s713, 128
        $region60: #{tpu_custom_call.1} parent=55 // pred_fallthru
          _
      $region56: #{tpu_custom_call.1} parent=5 // pred_fallthru
        _
    $region6: #{tpu_custom_call.1} parent=1 // loop_footer
      %s23 = sadd.s32 1, %s19
    $region7: #{tpu_custom_call.1} parent=1 // loop_footer_branch
      %18 = sbr.rel target = $region3
    $region8: #{tpu_custom_call.1} parent=1 // loop_exit
      _
    %719 = vsyncpa [#allocation6], 1
    %s720 = scalar_lea.sflag [#allocation6], 1
    %721 = vsyncpa %s720, 1
    %722 = vsyncpa [#allocation7], 1
    %s723 = scalar_lea.sflag [#allocation7], 1
    %724 = vsyncpa %s723, 1
    %725 = vsyncpa [#allocation8], 1
    %s726 = scalar_lea.sflag [#allocation8], 1
    %727 = vsyncpa %s726, 1
    %728 = vsyncpa [#allocation11], 1

</llo_original>
